<compile_context>
chip_gen: v5e
topology: v5e:2x2
jax: 0.10.0
libtpu: 0.0.40
codegen_flags: <defaults>
</compile_context>

<pallas_src>
import jax
import jax.numpy as jnp
from jax.experimental import pallas as pl
from jax.experimental.pallas import tpu as pltpu


def _cdiv(a, b):
    return -(-a // b)


def _q_mlp_kernel(obs_ref, act_ref, w1o_ref, w1a_ref, b1_ref,
                  w2_ref, b2_ref, w3_ref, b3_ref, q_ref):
    # All activations are feature-major (H, bm): lane-dense for H multiples of
    # 128 lanes of batch, so bias-add / ReLU / stores use full vregs.
    # Layer 1: h = relu(W1o^T @ obs + W1a^T @ act + b1)        -> (H1, bm)
    h = jnp.dot(w1o_ref[...], obs_ref[...], preferred_element_type=jnp.float32)
    h = h + jnp.dot(w1a_ref[...], act_ref[...], preferred_element_type=jnp.float32)
    h = jnp.maximum(h + b1_ref[...], 0.0)
    # Layer 2: h = relu(W2^T @ h + b2)                          -> (H2, bm)
    h = jnp.dot(w2_ref[...], h, preferred_element_type=jnp.float32) + b2_ref[...]
    h = jnp.maximum(h, 0.0)
    # Layer 3: q = W3^T @ h + b3                                -> (1, bm)
    q = jnp.dot(w3_ref[...], h, preferred_element_type=jnp.float32) + b3_ref[...]
    q_ref[0] = q.astype(q_ref.dtype)          # q_ref block is (1, 1, bm)


def _tensorcores_per_chip():
    """Best-effort detection of TensorCores per chip (v7x has 2)."""
    try:
        kind = jax.devices()[0].device_kind.lower()
    except Exception:
        return 1
    return 2 if "7" in kind else 1


def _choose_tiling(B, n_cores, bm_cap=2048):
    """Pick (bm, num_tiles, B_pad) with bm a multiple of 128 lanes.

    Single-TC chips: one tile as large as possible (cap 2048) to amortize the
    ~0.35us/grid-step overhead.  Dual-TC (v7x): tile count is a multiple of
    the core count so the "parallel" grid axis splits evenly.
    """
    lanes = 128
    B_lanes = _cdiv(B, lanes) * lanes                 # batch rounded to lanes
    num_tiles = max(1, _cdiv(B_lanes, bm_cap))
    if n_cores > 1 and B_lanes >= n_cores * lanes:
        num_tiles = max(num_tiles, n_cores)
        num_tiles = _cdiv(num_tiles, n_cores) * n_cores
    bm = _cdiv(_cdiv(B_lanes, num_tiles), lanes) * lanes
    bm = max(lanes, min(bm, max(bm_cap, lanes)))
    num_tiles = _cdiv(B_lanes, bm)
    B_pad = num_tiles * bm
    return bm, num_tiles, B_pad


def mlp_q_function(obs, act, params, *, bm=None):
    """Pallas implementation of MLPQFunction.forward.

    obs: [B, obs_dim] float32
    act: [B, act_dim] float32
    params: dict with w1 [obs_dim+act_dim, H1], b1 [1, H1], w2 [H1, H2],
            b2 [1, H2], w3 [H2, 1], b3 [1, 1]
    returns: [B] float32  (matches torch.squeeze(q, -1))
    """
    B, obs_dim = obs.shape
    act_dim = act.shape[1]
    w1, b1 = params["w1"], params["b1"]
    w2, b2 = params["w2"], params["b2"]
    w3, b3 = params["w3"], params["b3"]
    H1 = w1.shape[1]
    H2 = w2.shape[1]

    # Transposed / split weights for the feature-major formulation.  The W1
    # split point must match torch.cat([obs, act], dim=-1) ordering exactly.
    w1o_t = w1[:obs_dim].T            # (H1, obs_dim)
    w1a_t = w1[obs_dim:].T            # (H1, act_dim)
    w2_t = w2.T                       # (H2, H1)
    w3r = w3.reshape(1, H2)           # (1, H2)   (== w3.T for a column vector)
    b1c = b1.reshape(H1, 1)           # broadcast along lanes (batch)
    b2c = b2.reshape(H2, 1)
    b3c = b3.reshape(1, 1)

    if bm is not None:
        bm = max(128, _cdiv(bm, 128) * 128)
        num_tiles = pl.cdiv(B, bm)
        B_pad = num_tiles * bm
    else:
        bm, num_tiles, B_pad = _choose_tiling(B, _tensorcores_per_chip())

    # Feature-major inputs: (dim, B_pad).  Transpose + batch padding fuse into
    # one XLA copy; padded columns produce finite garbage that is sliced off.
    # TODO(synk): ideally the caller supplies obs/act already feature-major.
    pad = B_pad - B
    obs_fm = jnp.pad(obs.T, ((0, 0), (0, pad)))
    act_fm = jnp.pad(act.T, ((0, 0), (0, pad)))

    q3d = pl.pallas_call(
        _q_mlp_kernel,
        out_shape=jax.ShapeDtypeStruct((num_tiles, 1, bm), jnp.float32),
        grid_spec=pltpu.PrefetchScalarGridSpec(
            num_scalar_prefetch=0,
            grid=(num_tiles,),
            in_specs=[
                pl.BlockSpec((obs_dim, bm), lambda i: (0, i)),   # obs tile (feat-major)
                pl.BlockSpec((act_dim, bm), lambda i: (0, i)),   # act tile (feat-major)
                pl.BlockSpec((H1, obs_dim), lambda i: (0, 0)),   # W1[:obs_dim]^T
                pl.BlockSpec((H1, act_dim), lambda i: (0, 0)),   # W1[obs_dim:]^T
                pl.BlockSpec((H1, 1), lambda i: (0, 0)),         # b1 column
                pl.BlockSpec((H2, H1), lambda i: (0, 0)),        # W2^T
                pl.BlockSpec((H2, 1), lambda i: (0, 0)),         # b2 column
                pl.BlockSpec((1, H2), lambda i: (0, 0)),         # W3 row
                pl.BlockSpec((1, 1), lambda i: (0, 0)),          # b3
            ],
            out_specs=pl.BlockSpec((1, 1, bm), lambda i: (i, 0, 0)),
        ),
        compiler_params=pltpu.CompilerParams(
            dimension_semantics=("parallel",),
        ),
    )(obs_fm, act_fm, w1o_t, w1a_t, b1c, w2_t, b2c, w3r, b3c)

    # (num_tiles, 1, bm) -> (B_pad,) -> drop the padded columns.
    return q3d.reshape(-1)[:B]


def init_params(key, obs_dim, act_dim, hidden_sizes):
    sizes = [obs_dim + act_dim] + list(hidden_sizes) + [1]
    params = {}
    for j in range(len(sizes) - 1):
        key, kw, kb = jax.random.split(key, 3)
        fan_in = sizes[j]
        bound = 1.0 / jnp.sqrt(fan_in)  # mimic torch.nn.Linear default init range
        params[f"w{j + 1}"] = jax.random.uniform(
            kw, (sizes[j], sizes[j + 1]), jnp.float32, -bound, bound
        )
        params[f"b{j + 1}"] = jax.random.uniform(
            kb, (1, sizes[j + 1]), jnp.float32, -bound, bound
        )
    return params


def _reference_forward(obs, act, params):
    # Pure-JAX reference for sanity checking.
    x = jnp.concatenate([obs, act], axis=-1)
    h = jnp.maximum(x @ params["w1"] + params["b1"], 0.0)
    h = jnp.maximum(h @ params["w2"] + params["b2"], 0.0)
    q = h @ params["w3"] + params["b3"]
    return jnp.squeeze(q, -1)


if __name__ == "__main__":
    obs_dim, act_dim = 24, 8
    hidden_sizes = (32, 32)

    key = jax.random.PRNGKey(0)
    key, k_obs, k_act, k_par = jax.random.split(key, 4)
    params = init_params(k_par, obs_dim, act_dim, hidden_sizes)

    # Main case: batch is a multiple of 128 -> lane-dense path, auto tiling.
    B = 256
    obs = jax.random.normal(k_obs, (B, obs_dim), jnp.float32)
    act = jax.random.normal(k_act, (B, act_dim), jnp.float32)
    q = jax.block_until_ready(mlp_q_function(obs, act, params))
    q_ref = _reference_forward(obs, act, params)
    assert q.shape == (B,), q.shape
    assert jnp.allclose(q, q_ref, atol=1e-4, rtol=1e-4), (q, q_ref)

    # Explicit bm: forces a multi-tile grid (2 tiles of 128).
    q_multi = jax.block_until_ready(mlp_q_function(obs, act, params, bm=128))
    assert q_multi.shape == (B,), q_multi.shape
    assert jnp.allclose(q_multi, q_ref, atol=1e-4, rtol=1e-4), (q_multi, q_ref)

    # Odd batch: exercises the lane-rounded pad + slice path.
    B2 = 13
    obs2 = obs[:B2]
    act2 = act[:B2]
    q2 = jax.block_until_ready(mlp_q_function(obs2, act2, params))
    q2_ref = _reference_forward(obs2, act2, params)
    assert q2.shape == (B2,), q2.shape
    assert jnp.allclose(q2, q2_ref, atol=1e-4, rtol=1e-4), (q2, q2_ref)

    print("KERNEL_OK")
</pallas_src>

<mosaic_0001>
module attributes {stable_mosaic.version = 11 : i64} {
  func.func @_q_mlp_kernel(%arg0: i32, %arg1: memref<24x256xf32, #tpu.memory_space<vmem>>, %arg2: memref<8x256xf32, #tpu.memory_space<vmem>>, %arg3: memref<32x24xf32, #tpu.memory_space<vmem>>, %arg4: memref<32x8xf32, #tpu.memory_space<vmem>>, %arg5: memref<32x1xf32, #tpu.memory_space<vmem>>, %arg6: memref<32x32xf32, #tpu.memory_space<vmem>>, %arg7: memref<32x1xf32, #tpu.memory_space<vmem>>, %arg8: memref<1x32xf32, #tpu.memory_space<vmem>>, %arg9: memref<1x1xf32, #tpu.memory_space<vmem>>, %arg10: memref<1x1x256xf32, #tpu.memory_space<vmem>>) attributes {dimension_semantics = [#tpu.dimension_semantics<parallel>], iteration_bounds = array<i64: 1>, scalar_prefetch = 0 : i64, scratch_operands = 0 : i64, tpu.core_type = #tpu.core_type<tc>, window_params = [{transform_indices = @transform_0, window_bounds = array<i64: 24, 256>}, {transform_indices = @transform_1, window_bounds = array<i64: 8, 256>}, {pipeline_mode = #tpu.pipeline_mode<synchronous>, transform_indices = @transform_2, window_bounds = array<i64: 32, 24>}, {pipeline_mode = #tpu.pipeline_mode<synchronous>, transform_indices = @transform_3, window_bounds = array<i64: 32, 8>}, {pipeline_mode = #tpu.pipeline_mode<synchronous>, transform_indices = @transform_4, window_bounds = array<i64: 32, 1>}, {pipeline_mode = #tpu.pipeline_mode<synchronous>, transform_indices = @transform_5, window_bounds = array<i64: 32, 32>}, {pipeline_mode = #tpu.pipeline_mode<synchronous>, transform_indices = @transform_6, window_bounds = array<i64: 32, 1>}, {pipeline_mode = #tpu.pipeline_mode<synchronous>, transform_indices = @transform_7, window_bounds = array<i64: 1, 32>}, {pipeline_mode = #tpu.pipeline_mode<synchronous>, transform_indices = @transform_8, window_bounds = array<i64: 1, 1>}, {transform_indices = @transform_9, window_bounds = array<i64: 1, 1, 256>}]} {
    %c0 = arith.constant 0 : index
    %c0_0 = arith.constant 0 : index
    %0 = vector.load %arg3[%c0, %c0_0] : memref<32x24xf32, #tpu.memory_space<vmem>>, vector<32x24xf32>
    %c0_1 = arith.constant 0 : index
    %c0_2 = arith.constant 0 : index
    %1 = vector.load %arg1[%c0_1, %c0_2] : memref<24x256xf32, #tpu.memory_space<vmem>>, vector<24x256xf32>
    %cst = arith.constant dense<0.000000e+00> : vector<32x256xf32>
    %2 = tpu.matmul %0, %1, %cst {dimension_numbers = #tpu.dot_dimension_numbers<[1], [0], [0], [1], [0, 0, 1, 1], [], []>} : vector<32x24xf32>, vector<24x256xf32>, vector<32x256xf32> -> vector<32x256xf32>
    %c0_3 = arith.constant 0 : index
    %c0_4 = arith.constant 0 : index
    %3 = vector.load %arg4[%c0_3, %c0_4] : memref<32x8xf32, #tpu.memory_space<vmem>>, vector<32x8xf32>
    %c0_5 = arith.constant 0 : index
    %c0_6 = arith.constant 0 : index
    %4 = vector.load %arg2[%c0_5, %c0_6] : memref<8x256xf32, #tpu.memory_space<vmem>>, vector<8x256xf32>
    %cst_7 = arith.constant dense<0.000000e+00> : vector<32x256xf32>
    %5 = tpu.matmul %3, %4, %cst_7 {dimension_numbers = #tpu.dot_dimension_numbers<[1], [0], [0], [1], [0, 0, 1, 1], [], []>} : vector<32x8xf32>, vector<8x256xf32>, vector<32x256xf32> -> vector<32x256xf32>
    %6 = arith.addf %2, %5 : vector<32x256xf32>
    %c0_8 = arith.constant 0 : index
    %c0_9 = arith.constant 0 : index
    %7 = vector.load %arg5[%c0_8, %c0_9] : memref<32x1xf32, #tpu.memory_space<vmem>>, vector<32x1xf32>
    %8 = vector.broadcast %7 : vector<32x1xf32> to vector<32x256xf32>
    %9 = arith.addf %6, %8 : vector<32x256xf32>
    %cst_10 = arith.constant 0.000000e+00 : f32
    %10 = vector.broadcast %cst_10 : f32 to vector<32x256xf32>
    %11 = arith.maximumf %9, %10 : vector<32x256xf32>
    %c0_11 = arith.constant 0 : index
    %c0_12 = arith.constant 0 : index
    %12 = vector.load %arg6[%c0_11, %c0_12] : memref<32x32xf32, #tpu.memory_space<vmem>>, vector<32x32xf32>
    %cst_13 = arith.constant dense<0.000000e+00> : vector<32x256xf32>
    %13 = tpu.matmul %12, %11, %cst_13 {dimension_numbers = #tpu.dot_dimension_numbers<[1], [0], [0], [1], [0, 0, 1, 1], [], []>} : vector<32x32xf32>, vector<32x256xf32>, vector<32x256xf32> -> vector<32x256xf32>
    %c0_14 = arith.constant 0 : index
    %c0_15 = arith.constant 0 : index
    %14 = vector.load %arg7[%c0_14, %c0_15] : memref<32x1xf32, #tpu.memory_space<vmem>>, vector<32x1xf32>
    %15 = vector.broadcast %14 : vector<32x1xf32> to vector<32x256xf32>
    %16 = arith.addf %13, %15 : vector<32x256xf32>
    %cst_16 = arith.constant 0.000000e+00 : f32
    %17 = vector.broadcast %cst_16 : f32 to vector<32x256xf32>
    %18 = arith.maximumf %16, %17 : vector<32x256xf32>
    %c0_17 = arith.constant 0 : index
    %c0_18 = arith.constant 0 : index
    %19 = vector.load %arg8[%c0_17, %c0_18] : memref<1x32xf32, #tpu.memory_space<vmem>>, vector<1x32xf32>
    %cst_19 = arith.constant dense<0.000000e+00> : vector<1x256xf32>
    %20 = tpu.matmul %19, %18, %cst_19 {dimension_numbers = #tpu.dot_dimension_numbers<[1], [0], [0], [1], [0, 0, 1, 1], [], []>} : vector<1x32xf32>, vector<32x256xf32>, vector<1x256xf32> -> vector<1x256xf32>
    %c0_20 = arith.constant 0 : index
    %c0_21 = arith.constant 0 : index
    %21 = vector.load %arg9[%c0_20, %c0_21] : memref<1x1xf32, #tpu.memory_space<vmem>>, vector<1x1xf32>
    %22 = vector.broadcast %21 : vector<1x1xf32> to vector<1x256xf32>
    %23 = arith.addf %20, %22 : vector<1x256xf32>
    %c0_22 = arith.constant 0 : index
    %c0_23 = arith.constant 0 : index
    %c0_24 = arith.constant 0 : index
    %24 = vector.load %arg10[%c0_22, %c0_23, %c0_24] : memref<1x1x256xf32, #tpu.memory_space<vmem>>, vector<1x1x256xf32>
    %25 = vector.shape_cast %24 : vector<1x1x256xf32> to vector<1x256xf32>
    %26 = vector.shape_cast %23 : vector<1x256xf32> to vector<1x1x256xf32>
    tpu.vector_store %arg10[%c0_22, %c0_23, %c0_24], %26 {strides = array<i32>} : memref<1x1x256xf32, #tpu.memory_space<vmem>>, vector<1x1x256xf32>,
    return
  }
  func.func @transform_0(%arg0: i32) -> (i32, i32) {
    %c0_i32 = arith.constant 0 : i32
    %c0_i32_0 = arith.constant 0 : i32
    return %c0_i32, %arg0 : i32, i32
  }
  func.func @transform_1(%arg0: i32) -> (i32, i32) {
    %c0_i32 = arith.constant 0 : i32
    %c0_i32_0 = arith.constant 0 : i32
    return %c0_i32, %arg0 : i32, i32
  }
  func.func @transform_2(%arg0: i32) -> (i32, i32) {
    %c0_i32 = arith.constant 0 : i32
    %c0_i32_0 = arith.constant 0 : i32
    %c0_i32_1 = arith.constant 0 : i32
    return %c0_i32, %c0_i32_0 : i32, i32
  }
  func.func @transform_3(%arg0: i32) -> (i32, i32) {
    %c0_i32 = arith.constant 0 : i32
    %c0_i32_0 = arith.constant 0 : i32
    %c0_i32_1 = arith.constant 0 : i32
    return %c0_i32, %c0_i32_0 : i32, i32
  }
  func.func @transform_4(%arg0: i32) -> (i32, i32) {
    %c0_i32 = arith.constant 0 : i32
    %c0_i32_0 = arith.constant 0 : i32
    %c0_i32_1 = arith.constant 0 : i32
    return %c0_i32, %c0_i32_0 : i32, i32
  }
  func.func @transform_5(%arg0: i32) -> (i32, i32) {
    %c0_i32 = arith.constant 0 : i32
    %c0_i32_0 = arith.constant 0 : i32
    %c0_i32_1 = arith.constant 0 : i32
    return %c0_i32, %c0_i32_0 : i32, i32
  }
  func.func @transform_6(%arg0: i32) -> (i32, i32) {
    %c0_i32 = arith.constant 0 : i32
    %c0_i32_0 = arith.constant 0 : i32
    %c0_i32_1 = arith.constant 0 : i32
    return %c0_i32, %c0_i32_0 : i32, i32
  }
  func.func @transform_7(%arg0: i32) -> (i32, i32) {
    %c0_i32 = arith.constant 0 : i32
    %c0_i32_0 = arith.constant 0 : i32
    %c0_i32_1 = arith.constant 0 : i32
    return %c0_i32, %c0_i32_0 : i32, i32
  }
  func.func @transform_8(%arg0: i32) -> (i32, i32) {
    %c0_i32 = arith.constant 0 : i32
    %c0_i32_0 = arith.constant 0 : i32
    %c0_i32_1 = arith.constant 0 : i32
    return %c0_i32, %c0_i32_0 : i32, i32
  }
  func.func @transform_9(%arg0: i32) -> (i32, i32, i32) {
    %c0_i32 = arith.constant 0 : i32
    %c0_i32_0 = arith.constant 0 : i32
    %c0_i32_1 = arith.constant 0 : i32
    return %arg0, %c0_i32, %c0_i32_0 : i32, i32, i32
  }
}

</mosaic_0001>

<llo_original>
// kernel: tpu_custom_call.1
$region0: #{tpu_custom_call.1}
  #allocation0 [shape = 'u32[]', space=smem, size = 0x4, offset = 0x4, fixed_abs, tag = 'smem constant byte address 0x4 - core index']
  #allocation1 [shape = 'u32[72,128]{1,0:T(1,128)}', space=vmem, size = 0x9000, scoped, tag = 'internal scratch']
  #allocation2 [shape = 'f32[1,1]{1,0:T(1,128)S(1)}', space=vmem, size = 0x200, scoped, tag = 'scoped memory for tpu_custom_call.1']
  %s0 = inlined_call_operand.vmem [shape: f32[24,256], index: 0, kind: input, shape index: {}]
  %s1 = inlined_call_operand.vmem [shape: f32[8,256], index: 1, kind: input, shape index: {}]
  %s2 = inlined_call_operand.vmem [shape: f32[32,24], index: 2, kind: input, shape index: {}]
  %s3 = inlined_call_operand.vmem [shape: f32[32,8], index: 3, kind: input, shape index: {}]
  %s4 = inlined_call_operand.vmem [shape: f32[32,1], index: 4, kind: input, shape index: {}]
  %s5 = inlined_call_operand.vmem [shape: f32[32,32], index: 5, kind: input, shape index: {}]
  %s6 = inlined_call_operand.vmem [shape: f32[32,1], index: 6, kind: input, shape index: {}]
  %s7 = inlined_call_operand.vmem [shape: f32[1,32], index: 7, kind: input, shape index: {}]
  %s8 = inlined_call_operand.<no memory space> [shape: f32[1,1], index: 8, kind: input, shape index: {}]
  %s9 = inlined_call_operand.hbm [shape: f32[1,1,256], index: 9, kind: output, shape index: {}]
  %s10 = sld [smem:[#allocation0]]
  $region46: #{tpu_custom_call.1} parent=0
    _
  %s12 = ssub.s32 1, %s10
  %s13 = scalar_select 0, %s12, %s10
  %v14 = vstv %s8
  %15 = vst [vmem:[#allocation2] sm:$0x1] %v14
  $region1: #{tpu_custom_call.1} parent=0
    #allocation3 [shape = 'u8[1024]{0}', space=vmem, size = 0x400, scoped, tag = 'output window, operand 0, single buffered']
    #allocation4 [shape = 's32[1]{0}', space=sflag, size = 0x4, scoped, tag = 'scoped memory for tpu_custom_call.1']
    %16 = vsyncpa [#allocation4], 0
    // Predicated region
    $region2: #{tpu_custom_call.1} parent=1 // pred_check
      _
    $region3: #{tpu_custom_call.1} parent=1 // pred_check_branch
      %18 = sbr.rel (0) target = $region5
    $region4: #{tpu_custom_call.1} parent=1 // pred_region
      _
    $region5: #{tpu_custom_call.1} parent=1 // pred_fallthru
      _
    // Predicated region
    $region6: #{tpu_custom_call.1} parent=1 // pred_check
      _
    $region7: #{tpu_custom_call.1} parent=1 // pred_check_branch
      %20 = sbr.rel (0) target = $region9
    $region8: #{tpu_custom_call.1} parent=1 // pred_region
      _
    $region9: #{tpu_custom_call.1} parent=1 // pred_fallthru
      _
    // Predicated region
    $region10: #{tpu_custom_call.1} parent=1 // pred_check
      _
    $region11: #{tpu_custom_call.1} parent=1 // pred_check_branch
      %22 = sbr.rel (0) target = $region13
    $region12: #{tpu_custom_call.1} parent=1 // pred_region
      _
    $region13: #{tpu_custom_call.1} parent=1 // pred_fallthru
      _
    // Predicated region
    $region14: #{tpu_custom_call.1} parent=1 // pred_check
      _
    $region15: #{tpu_custom_call.1} parent=1 // pred_check_branch
      %24 = sbr.rel (0) target = $region17
    $region16: #{tpu_custom_call.1} parent=1 // pred_region
      _
    $region17: #{tpu_custom_call.1} parent=1 // pred_fallthru
      _
    // Predicated region
    $region18: #{tpu_custom_call.1} parent=1 // pred_check
      _
    $region19: #{tpu_custom_call.1} parent=1 // pred_check_branch
      %26 = sbr.rel (0) target = $region21
    $region20: #{tpu_custom_call.1} parent=1 // pred_region
      _
    $region21: #{tpu_custom_call.1} parent=1 // pred_fallthru
      _
    // Predicated region
    $region22: #{tpu_custom_call.1} parent=1 // pred_check
      _
    $region23: #{tpu_custom_call.1} parent=1 // pred_check_branch
      %28 = sbr.rel (0) target = $region25
    $region24: #{tpu_custom_call.1} parent=1 // pred_region
      _
    $region25: #{tpu_custom_call.1} parent=1 // pred_fallthru
      _
    // Predicated region
    $region26: #{tpu_custom_call.1} parent=1 // pred_check
      _
    $region27: #{tpu_custom_call.1} parent=1 // pred_check_branch
      %30 = sbr.rel (0) target = $region29
    $region28: #{tpu_custom_call.1} parent=1 // pred_region
      _
    $region29: #{tpu_custom_call.1} parent=1 // pred_fallthru
      _
    // Predicated region
    $region30: #{tpu_custom_call.1} parent=1 // pred_check
      _
    $region31: #{tpu_custom_call.1} parent=1 // pred_check_branch
      %32 = sbr.rel (0) target = $region33
    $region32: #{tpu_custom_call.1} parent=1 // pred_region
      _
    $region33: #{tpu_custom_call.1} parent=1 // pred_fallthru
      _
    // Predicated region
    $region34: #{tpu_custom_call.1} parent=1 // pred_check
      _
    $region35: #{tpu_custom_call.1} parent=1 // pred_check_branch
      %34 = sbr.rel (0) target = $region37
    $region36: #{tpu_custom_call.1} parent=1 // pred_region
      _
    $region37: #{tpu_custom_call.1} parent=1 // pred_fallthru
      _
    %v35 = vld [vmem:[%s2] sm:$0xff]
    %v36 = vld [vmem:[%s2 + $0x8] sm:$0xff]
    %v37 = vld [vmem:[%s2 + $0x10] sm:$0xff]
    %v38 = vld [vmem:[%s2 + $0x18] sm:$0xff]
    %v39 = vld [vmem:[%s0] sm:$0xff]
    %v40 = vld [vmem:[%s0 + $0x8] sm:$0xff]
    %v41 = vld [vmem:[%s0 + $0x10] sm:$0xff]
    %v42 = vld [vmem:[%s0 + $0x18] sm:$0xff]
    %v43 = vld [vmem:[%s0 + $0x20] sm:$0xff]
    %v44 = vld [vmem:[%s0 + $0x28] sm:$0xff]
    %v45 = vld [vmem:[%s3] sm:$0xff]
    %v46 = vld [vmem:[%s3 + $0x8] sm:$0xff]
    %v47 = vld [vmem:[%s3 + $0x10] sm:$0xff]
    %v48 = vld [vmem:[%s3 + $0x18] sm:$0xff]
    %v49 = vld [vmem:[%s1] sm:$0xff]
    %v50 = vld [vmem:[%s1 + $0x8] sm:$0xff]
    %vm51 = vcmask 64512
    %v53 = vsel %vm51, %v45, 0
    %v56 = vsel %vm51, %v46, 0
    %v59 = vsel %vm51, %v47, 0
    %v62 = vsel %vm51, %v48, 0
    %64 = vmatpush.msra.mxu0 0.0
    %65 = vmatpush.msra.mxu0 0.0
    %66 = vmatpush.msra.mxu0 0.0
    %67 = vmatpush.msra.mxu0 0.0
    %68 = vmatpush.msra.mxu0 0.0
    %69 = vmatpush.msra.mxu0 0.0
    %70 = vmatpush.msra.mxu0 0.0
    %71 = vmatpush.msra.mxu0 0.0
    %72 = vmatpush.msra.mxu0 0.0
    %73 = vmatpush.msra.mxu0 0.0
    %74 = vmatpush.msra.mxu0 0.0
    %75 = vmatpush.msra.mxu0 0.0
    %76 = vmatpush.msra.mxu0 0.0
    %77 = vmatpush.msra.mxu0 0.0
    %78 = vmatpush.msra.mxu0 0.0
    %79 = vmatpush.msra.mxu0 %v49
    %80 = vmatmul.f32.gmra.mxu0 %v53
    %v81 = vpop.f32.mrf.mxu0
    %v82 = vadd.f32 0.0, %v81
    %83 = vmatmul.f32.gmra.mxu0 %v56
    %v84 = vpop.f32.mrf.mxu0
    %v85 = vadd.f32 0.0, %v84
    %86 = vmatmul.f32.gmra.mxu0 %v59
    %v87 = vpop.f32.mrf.mxu0
    %v88 = vadd.f32 0.0, %v87
    %89 = vmatmul.f32.gmra.mxu0 %v62
    %v90 = vpop.f32.mrf.mxu0
    %v91 = vadd.f32 0.0, %v90
    %92 = vdwg.mxu0
    %93 = vmatpush.msra.mxu0 0.0
    %94 = vmatpush.msra.mxu0 0.0
    %95 = vmatpush.msra.mxu0 0.0
    %96 = vmatpush.msra.mxu0 0.0
    %97 = vmatpush.msra.mxu0 0.0
    %98 = vmatpush.msra.mxu0 0.0
    %99 = vmatpush.msra.mxu0 0.0
    %100 = vmatpush.msra.mxu0 0.0
    %101 = vmatpush.msra.mxu0 0.0
    %102 = vmatpush.msra.mxu0 0.0
    %103 = vmatpush.msra.mxu0 0.0
    %104 = vmatpush.msra.mxu0 0.0
    %105 = vmatpush.msra.mxu0 0.0
    %106 = vmatpush.msra.mxu0 0.0
    %107 = vmatpush.msra.mxu0 0.0
    %108 = vmatpush.msra.mxu0 %v50
    %109 = vmatmul.f32.gmra.mxu0 %v53
    %v110 = vpop.f32.mrf.mxu0
    %v111 = vadd.f32 0.0, %v110
    %112 = vmatmul.f32.gmra.mxu0 %v56
    %v113 = vpop.f32.mrf.mxu0
    %v114 = vadd.f32 0.0, %v113
    %115 = vmatmul.f32.gmra.mxu0 %v59
    %v116 = vpop.f32.mrf.mxu0
    %v117 = vadd.f32 0.0, %v116
    %118 = vmatmul.f32.gmra.mxu0 %v62
    %v119 = vpop.f32.mrf.mxu0
    %v120 = vadd.f32 0.0, %v119
    %121 = vdwg.mxu0
    %vm122 = vcmask 195584
    %v124 = vsel %vm122, %v35, 0
    %v127 = vsel %vm122, %v36, 0
    %v130 = vsel %vm122, %v37, 0
    %v133 = vsel %vm122, %v38, 0
    %135 = vmatpush.msra.mxu0 0.0
    %136 = vmatpush.msra.mxu0 0.0
    %137 = vmatpush.msra.mxu0 0.0
    %138 = vmatpush.msra.mxu0 0.0
    %139 = vmatpush.msra.mxu0 0.0
    %140 = vmatpush.msra.mxu0 0.0
    %141 = vmatpush.msra.mxu0 0.0
    %142 = vmatpush.msra.mxu0 0.0
    %143 = vmatpush.msra.mxu0 0.0
    %144 = vmatpush.msra.mxu0 0.0
    %145 = vmatpush.msra.mxu0 0.0
    %146 = vmatpush.msra.mxu0 0.0
    %147 = vmatpush.msra.mxu0 0.0
    %148 = vmatpush.msra.mxu0 %v43
    %149 = vmatpush.msra.mxu0 %v41
    %150 = vmatpush.msra.mxu0 %v39
    %151 = vmatmul.f32.gmra.mxu0 %v124
    %v152 = vpop.f32.mrf.mxu0
    %v153 = vadd.f32 %v82, %v152
    %154 = vmatmul.f32.gmra.mxu0 %v127
    %v155 = vpop.f32.mrf.mxu0
    %v156 = vadd.f32 %v85, %v155
    %157 = vmatmul.f32.gmra.mxu0 %v130
    %v158 = vpop.f32.mrf.mxu0
    %v159 = vadd.f32 %v88, %v158
    %160 = vmatmul.f32.gmra.mxu0 %v133
    %v161 = vpop.f32.mrf.mxu0
    %v162 = vadd.f32 %v91, %v161
    %163 = vdwg.mxu0
    %164 = vmatpush.msra.mxu0 0.0
    %165 = vmatpush.msra.mxu0 0.0
    %166 = vmatpush.msra.mxu0 0.0
    %167 = vmatpush.msra.mxu0 0.0
    %168 = vmatpush.msra.mxu0 0.0
    %169 = vmatpush.msra.mxu0 0.0
    %170 = vmatpush.msra.mxu0 0.0
    %171 = vmatpush.msra.mxu0 0.0
    %172 = vmatpush.msra.mxu0 0.0
    %173 = vmatpush.msra.mxu0 0.0
    %174 = vmatpush.msra.mxu0 0.0
    %175 = vmatpush.msra.mxu0 0.0
    %176 = vmatpush.msra.mxu0 0.0
    %177 = vmatpush.msra.mxu0 %v44
    %178 = vmatpush.msra.mxu0 %v42
    %179 = vmatpush.msra.mxu0 %v40
    %180 = vmatmul.f32.gmra.mxu0 %v124
    %v181 = vpop.f32.mrf.mxu0
    %v182 = vadd.f32 %v111, %v181
    %183 = vmatmul.f32.gmra.mxu0 %v127
    %v184 = vpop.f32.mrf.mxu0
    %v185 = vadd.f32 %v114, %v184
    %186 = vmatmul.f32.gmra.mxu0 %v130
    %v187 = vpop.f32.mrf.mxu0
    %v188 = vadd.f32 %v117, %v187
    %189 = vmatmul.f32.gmra.mxu0 %v133
    %v190 = vpop.f32.mrf.mxu0
    %v191 = vadd.f32 %v120, %v190
    %192 = vdwg.mxu0
    %v193 = vld [vmem:[%s4] sm:$0xff]
    %v194 = vld [vmem:[%s4 + $0x8] sm:$0xff]
    %v195 = vld [vmem:[%s4 + $0x10] sm:$0xff]
    %v196 = vld [vmem:[%s4 + $0x18] sm:$0xff]
    %198 = vset.pattern.permute.xlu0 0
    %199 = vperm.xlu0 %198, %v193
    %v200 = vpop.permute.xlu0 %199
    %203 = vset.pattern.permute.xlu0 0
    %204 = vperm.xlu0 %203, %v194
    %v205 = vpop.permute.xlu0 %204
    %208 = vset.pattern.permute.xlu0 0
    %209 = vperm.xlu0 %208, %v195
    %v210 = vpop.permute.xlu0 %209
    %213 = vset.pattern.permute.xlu0 0
    %214 = vperm.xlu0 %213, %v196
    %v215 = vpop.permute.xlu0 %214
    %v217 = vadd.f32 %v153, %v200
    %v218 = vadd.f32 %v182, %v200
    %v219 = vadd.f32 %v156, %v205
    %v220 = vadd.f32 %v185, %v205
    %v221 = vadd.f32 %v159, %v210
    %v222 = vadd.f32 %v188, %v210
    %v223 = vadd.f32 %v162, %v215
    %v224 = vadd.f32 %v191, %v215
    %v225 = vmax.f32 %v217, 0.0
    %v226 = vmax.f32 %v218, 0.0
    %v227 = vmax.f32 %v219, 0.0
    %v228 = vmax.f32 %v220, 0.0
    %v229 = vmax.f32 %v221, 0.0
    %v230 = vmax.f32 %v222, 0.0
    %v231 = vmax.f32 %v223, 0.0
    %v232 = vmax.f32 %v224, 0.0
    %v233 = vld [vmem:[%s5] sm:$0xff]
    %v234 = vld [vmem:[%s5 + $0x8] sm:$0xff]
    %v235 = vld [vmem:[%s5 + $0x10] sm:$0xff]
    %v236 = vld [vmem:[%s5 + $0x18] sm:$0xff]
    %v237 = vld [vmem:[%s6] sm:$0xff]
    %v238 = vld [vmem:[%s6 + $0x8] sm:$0xff]
    %v239 = vld [vmem:[%s6 + $0x10] sm:$0xff]
    %v240 = vld [vmem:[%s6 + $0x18] sm:$0xff]
    %242 = vset.pattern.permute.xlu0 0
    %243 = vperm.xlu0 %242, %v237
    %v244 = vpop.permute.xlu0 %243
    %247 = vset.pattern.permute.xlu0 0
    %248 = vperm.xlu0 %247, %v238
    %v249 = vpop.permute.xlu0 %248
    %252 = vset.pattern.permute.xlu0 0
    %253 = vperm.xlu0 %252, %v239
    %v254 = vpop.permute.xlu0 %253
    %257 = vset.pattern.permute.xlu0 0
    %258 = vperm.xlu0 %257, %v240
    %v259 = vpop.permute.xlu0 %258
    %vm261 = vcmask 261120
    %v263 = vsel %vm261, %v233, 0
    %v266 = vsel %vm261, %v234, 0
    %v269 = vsel %vm261, %v235, 0
    %v272 = vsel %vm261, %v236, 0
    %274 = vmatpush.msra.mxu0 0.0
    %275 = vmatpush.msra.mxu0 0.0
    %276 = vmatpush.msra.mxu0 0.0
    %277 = vmatpush.msra.mxu0 0.0
    %278 = vmatpush.msra.mxu0 0.0
    %279 = vmatpush.msra.mxu0 0.0
    %280 = vmatpush.msra.mxu0 0.0
    %281 = vmatpush.msra.mxu0 0.0
    %282 = vmatpush.msra.mxu0 0.0
    %283 = vmatpush.msra.mxu0 0.0
    %284 = vmatpush.msra.mxu0 0.0
    %285 = vmatpush.msra.mxu0 0.0
    %286 = vmatpush.msra.mxu0 %v231
    %287 = vmatpush.msra.mxu0 %v229
    %288 = vmatpush.msra.mxu0 %v227
    %289 = vmatpush.msra.mxu0 %v225
    %290 = vmatmul.f32.gmra.mxu0 %v263
    %v291 = vpop.f32.mrf.mxu0
    %v292 = vadd.f32 %v244, %v291
    %293 = vmatmul.f32.gmra.mxu0 %v266
    %v294 = vpop.f32.mrf.mxu0
    %v295 = vadd.f32 %v249, %v294
    %296 = vmatmul.f32.gmra.mxu0 %v269
    %v297 = vpop.f32.mrf.mxu0
    %v298 = vadd.f32 %v254, %v297
    %299 = vmatmul.f32.gmra.mxu0 %v272
    %v300 = vpop.f32.mrf.mxu0
    %v301 = vadd.f32 %v259, %v300
    %302 = vdwg.mxu0
    %303 = vmatpush.msra.mxu0 0.0
    %304 = vmatpush.msra.mxu0 0.0
    %305 = vmatpush.msra.mxu0 0.0
    %306 = vmatpush.msra.mxu0 0.0
    %307 = vmatpush.msra.mxu0 0.0
    %308 = vmatpush.msra.mxu0 0.0
    %309 = vmatpush.msra.mxu0 0.0
    %310 = vmatpush.msra.mxu0 0.0
    %311 = vmatpush.msra.mxu0 0.0
    %312 = vmatpush.msra.mxu0 0.0
    %313 = vmatpush.msra.mxu0 0.0
    %314 = vmatpush.msra.mxu0 0.0
    %315 = vmatpush.msra.mxu0 %v232
    %316 = vmatpush.msra.mxu0 %v230
    %317 = vmatpush.msra.mxu0 %v228
    %318 = vmatpush.msra.mxu0 %v226
    %319 = vmatmul.f32.gmra.mxu0 %v263
    %v320 = vpop.f32.mrf.mxu0
    %v321 = vadd.f32 %v244, %v320
    %322 = vmatmul.f32.gmra.mxu0 %v266
    %v323 = vpop.f32.mrf.mxu0
    %v324 = vadd.f32 %v249, %v323
    %325 = vmatmul.f32.gmra.mxu0 %v269
    %v326 = vpop.f32.mrf.mxu0
    %v327 = vadd.f32 %v254, %v326
    %328 = vmatmul.f32.gmra.mxu0 %v272
    %v329 = vpop.f32.mrf.mxu0
    %v330 = vadd.f32 %v259, %v329
    %331 = vdwg.mxu0
    %v332 = vmax.f32 %v292, 0.0
    %v333 = vmax.f32 %v321, 0.0
    %v334 = vmax.f32 %v295, 0.0
    %v335 = vmax.f32 %v324, 0.0
    %v336 = vmax.f32 %v298, 0.0
    %v337 = vmax.f32 %v327, 0.0
    %v338 = vmax.f32 %v301, 0.0
    %v339 = vmax.f32 %v330, 0.0
    %v340 = vld [vmem:[%s7] sm:$0x1]
    %v341 = vld [vmem:[#allocation2] sm:$0x1]
    %343 = vset.pattern.permute.xlu0 0
    %344 = vperm.xlu0 %343, %v341
    %v345 = vpop.permute.xlu0 %344
    %v347 = vperm.slane %v345, 0
    %v349 = vsel %vm261, %v340, 0
    %351 = vmatpush.msra.mxu0 0.0
    %352 = vmatpush.msra.mxu0 0.0
    %353 = vmatpush.msra.mxu0 0.0
    %354 = vmatpush.msra.mxu0 0.0
    %355 = vmatpush.msra.mxu0 0.0
    %356 = vmatpush.msra.mxu0 0.0
    %357 = vmatpush.msra.mxu0 0.0
    %358 = vmatpush.msra.mxu0 0.0
    %359 = vmatpush.msra.mxu0 0.0
    %360 = vmatpush.msra.mxu0 0.0
    %361 = vmatpush.msra.mxu0 0.0
    %362 = vmatpush.msra.mxu0 0.0
    %363 = vmatpush.msra.mxu0 %v338
    %364 = vmatpush.msra.mxu0 %v336
    %365 = vmatpush.msra.mxu0 %v334
    %366 = vmatpush.msra.mxu0 %v332
    %367 = vmatmul.f32.gmra.mxu0 %v349
    %v368 = vpop.f32.mrf.mxu0
    %v369 = vadd.f32 %v347, %v368
    %370 = vdwg.mxu0
    %371 = vmatpush.msra.mxu0 0.0
    %372 = vmatpush.msra.mxu0 0.0
    %373 = vmatpush.msra.mxu0 0.0
    %374 = vmatpush.msra.mxu0 0.0
    %375 = vmatpush.msra.mxu0 0.0
    %376 = vmatpush.msra.mxu0 0.0
    %377 = vmatpush.msra.mxu0 0.0
    %378 = vmatpush.msra.mxu0 0.0
    %379 = vmatpush.msra.mxu0 0.0
    %380 = vmatpush.msra.mxu0 0.0
    %381 = vmatpush.msra.mxu0 0.0
    %382 = vmatpush.msra.mxu0 0.0
    %383 = vmatpush.msra.mxu0 %v339
    %384 = vmatpush.msra.mxu0 %v337
    %385 = vmatpush.msra.mxu0 %v335
    %386 = vmatpush.msra.mxu0 %v333
    %387 = vmatmul.f32.gmra.mxu0 %v349
    %v388 = vpop.f32.mrf.mxu0
    %v389 = vadd.f32 %v347, %v388
    %390 = vdwg.mxu0
    %v393 = vrot.slane %v389, 7
    %vm394 = vcmask 1040384
    %v395 = vsel %vm394, %v369, %v393
    %v397 = vlaneseq
    %vm398 = vcmp.ge.s32.totalorder %v397, 0
    %vm399 = vcmp.lt.s32.totalorder %v397, 256
    %vm400 = vmand %vm398, %vm399
    %401 = vst.msk [vmem:[#allocation3] sm:$0x3] %vm400, %v395
    // Predicated region
    $region38: #{tpu_custom_call.1} parent=1 // pred_check
      _
    $region39: #{tpu_custom_call.1} parent=1 // pred_check_branch
      %403 = sbr.rel (0) target = $region41
    $region40: #{tpu_custom_call.1} parent=1 // pred_region
      %405 = vsyncadd [#allocation4], 0
      %s407 = sshll.u32 [#allocation3], 4
      %s408 = int_to_ptr.vmem [resolvable:$true] %s407
      %s409 = sshll.u32 %s9, 4
      %s410 = int_to_ptr.hbm [resolvable:$true] %s409
      %412 = dma.vmem_to_hbm [thread:$0]  %s408, 32, %s410, [#allocation4]
    $region41: #{tpu_custom_call.1} parent=1 // pred_fallthru
      _
    // Predicated region
    $region42: #{tpu_custom_call.1} parent=1 // pred_check
      _
    $region43: #{tpu_custom_call.1} parent=1 // pred_check_branch
      %414 = sbr.rel (0) target = $region45
    $region44: #{tpu_custom_call.1} parent=1 // pred_region
      %416 = dma.done [#allocation4], 32
    $region45: #{tpu_custom_call.1} parent=1 // pred_fallthru
      _
    %417 = vsyncpa [#allocation4], 1

</llo_original>
